<compile_context>
chip_gen: v6e
topology: v6e:2x2x1
jax: 0.10.0
libtpu: 0.0.40
codegen_flags: <defaults>
</compile_context>

<pallas_src>
import functools

import jax
import jax.numpy as jnp
from jax.experimental import pallas as pl
from jax.experimental.pallas import tpu as pltpu


def _focal_loss_kernel(gamma, n_rows, tile_n, x_ref, t_ref, out_ref, acc_ref):
    # x_ref: [TILE_N, C] float, t_ref: [TILE_N, 1] int32,
    # out_ref: [1, 1] f32, acc_ref: [1, 1] f32 scratch (persists across grid steps).
    i = pl.program_id(0)

    @pl.when(i == 0)
    def _():
        acc_ref[...] = jnp.zeros_like(acc_ref)

    x = x_ref[...].astype(jnp.float32)                      # [T, C]
    t = t_ref[...]                                          # [T, 1] int32

    # Numerically stable row statistics — single exp pass over the tile.
    m = jnp.max(x, axis=1, keepdims=True)                   # [T, 1]
    z = x - m                                               # [T, C]
    ez = jnp.exp(z)                                         # [T, C]  (only full-matrix EUP op)
    sumexp = jnp.sum(ez, axis=1, keepdims=True)             # [T, 1]

    # Gather the target column BEFORE the focal modulation (one-hot mask on VPU/XLU).
    cls = jax.lax.broadcasted_iota(jnp.int32, x.shape, 1)   # [T, C]
    onehot = cls == t                                       # [T, C]
    z_t = jnp.sum(jnp.where(onehot, z, 0.0), axis=1, keepdims=True)    # [T, 1]
    ez_t = jnp.sum(jnp.where(onehot, ez, 0.0), axis=1, keepdims=True)  # [T, 1]

    # Focal modulation on per-row values only (O(N), not O(N*C)).
    logpt_t = z_t - jnp.log(sumexp)                         # [T, 1]
    pt_t = ez_t / sumexp                                    # [T, 1]
    one_minus_pt = jnp.maximum(1.0 - pt_t, 0.0)             # clamp vs. rounding
    mod_t = (one_minus_pt ** gamma) * logpt_t               # integer gamma -> integer_pow

    # Mask padded rows (beyond the real N).
    row_ids = i * tile_n + jax.lax.broadcasted_iota(jnp.int32, (tile_n, 1), 0)
    mod_t = jnp.where(row_ids < n_rows, mod_t, 0.0)

    acc_ref[...] += jnp.sum(mod_t, axis=(0, 1), keepdims=True)

    @pl.when(i == pl.num_programs(0) - 1)
    def _():
        out_ref[...] = -acc_ref[...] / jnp.float32(n_rows)


def focal_loss_softmax(logits, target, gamma=2, tile_n=None):
    """logits: [N, C] float (f32 or bf16), target: [N] int -> scalar float32 loss."""
    n, c = logits.shape

    # Tile-size heuristic: keep the (double-buffered) f32 logits tile well under the
    # scoped-VMEM default on all generations (v7x has half of v6e's VMEM).
    if tile_n is None:
        budget_bytes = 4 * 1024 * 1024                      # per buffer, conservative
        tile_n = budget_bytes // max(c * 4, 1)
        tile_n = max(8, min(1024, (tile_n // 8) * 8))
    tile_n = max(8, (tile_n // 8) * 8)
    tile_n = min(tile_n, pl.cdiv(n, 8) * 8)                 # don't exceed (padded) N

    n_pad = pl.cdiv(n, tile_n) * tile_n
    num_tiles = n_pad // tile_n

    x = logits
    t = target.astype(jnp.int32).reshape(n, 1)
    if n_pad != n:
        x = jnp.pad(x, ((0, n_pad - n), (0, 0)))
        t = jnp.pad(t, ((0, n_pad - n), (0, 0)))            # padded targets -> class 0, masked in-kernel

    kernel = functools.partial(_focal_loss_kernel, gamma, n, tile_n)

    cost = pl.CostEstimate(
        flops=int(8 * n_pad * c),
        transcendentals=int(n_pad * c + 2 * n_pad),
        bytes_accessed=int(n_pad * c * x.dtype.itemsize + n_pad * 4 + 4),
    )

    out = pl.pallas_call(
        kernel,
        out_shape=jax.ShapeDtypeStruct((1, 1), jnp.float32),
        grid_spec=pltpu.PrefetchScalarGridSpec(
            num_scalar_prefetch=0,
            grid=(num_tiles,),
            in_specs=[
                pl.BlockSpec((tile_n, c), lambda i: (i, 0)),
                pl.BlockSpec((tile_n, 1), lambda i: (i, 0)),
            ],
            out_specs=pl.BlockSpec((1, 1), lambda i: (0, 0)),
            scratch_shapes=[pltpu.VMEM((1, 1), jnp.float32)],
        ),
        compiler_params=pltpu.CompilerParams(
            dimension_semantics=("arbitrary",),             # sequential: scalar accumulator
        ),
        cost_estimate=cost,
    )(x, t)
    return out[0, 0]


def focal_loss_softmax_ref(logits, target, gamma=2):
    """Pure-JAX reference mirroring the PyTorch module."""
    logpt = jax.nn.log_softmax(logits.astype(jnp.float32), axis=1)
    pt = jnp.exp(logpt)
    logpt = ((1.0 - pt) ** gamma) * logpt
    picked = jnp.take_along_axis(logpt, target[:, None].astype(jnp.int32), axis=1)[:, 0]
    return -jnp.mean(picked)


if __name__ == "__main__":
    key = jax.random.PRNGKey(0)
    k1, k2 = jax.random.split(key)

    # Small shapes consistent with [N, C] logits / [N] targets.
    # N=20 is deliberately not a multiple of the 8-row tile to exercise the
    # multi-tile accumulation + padded-row masking paths.
    N, C = 20, 32
    logits = jax.random.normal(k1, (N, C), dtype=jnp.float32)
    target = jax.random.randint(k2, (N,), 0, C, dtype=jnp.int32)

    loss = focal_loss_softmax(logits, target, gamma=2, tile_n=8)
    loss = jax.block_until_ready(loss)

    ref = jax.block_until_ready(focal_loss_softmax_ref(logits, target, gamma=2))
    assert jnp.allclose(loss, ref, atol=1e-5, rtol=1e-5), (loss, ref)

    print("KERNEL_OK")
</pallas_src>

<mosaic_0001>
module attributes {stable_mosaic.version = 11 : i64} {
  func.func @_focal_loss_kernel(%arg0: i32, %arg1: memref<8x32xf32, #tpu.memory_space<vmem>>, %arg2: memref<8x1xi32, #tpu.memory_space<vmem>>, %arg3: memref<1x1xf32, #tpu.memory_space<vmem>>, %arg4: memref<1x1xf32, #tpu.memory_space<vmem>>) attributes {dimension_semantics = [#tpu.dimension_semantics<arbitrary>], iteration_bounds = array<i64: 3>, scalar_prefetch = 0 : i64, scratch_operands = 1 : i64, tpu.core_type = #tpu.core_type<tc>, window_params = [{transform_indices = @transform_0, window_bounds = array<i64: 8, 32>}, {transform_indices = @transform_1, window_bounds = array<i64: 8, 1>}, {pipeline_mode = #tpu.pipeline_mode<synchronous>, transform_indices = @transform_2, window_bounds = array<i64: 1, 1>}]} {
    %c0_i32 = arith.constant 0 : i32
    %0 = arith.cmpi eq, %arg0, %c0_i32 : i32
    %1 = arith.extui %0 : i1 to i32
    %c0_i32_0 = arith.constant 0 : i32
    %2 = arith.cmpi ne, %1, %c0_i32_0 : i32
    scf.if %2 {
      %cst_18 = arith.constant 0.000000e+00 : f32
      %51 = vector.broadcast %cst_18 : f32 to vector<1x1xf32>
      %c0_19 = arith.constant 0 : index
      %c0_20 = arith.constant 0 : index
      %52 = vector.load %arg4[%c0_19, %c0_20] : memref<1x1xf32, #tpu.memory_space<vmem>>, vector<1x1xf32>
      tpu.vector_store %arg4[%c0_19, %c0_20], %51 {strides = array<i32>} : memref<1x1xf32, #tpu.memory_space<vmem>>, vector<1x1xf32>,
    } else {
    }
    %c0 = arith.constant 0 : index
    %c0_1 = arith.constant 0 : index
    %3 = vector.load %arg1[%c0, %c0_1] : memref<8x32xf32, #tpu.memory_space<vmem>>, vector<8x32xf32>
    %c0_2 = arith.constant 0 : index
    %c0_3 = arith.constant 0 : index
    %4 = vector.load %arg2[%c0_2, %c0_3] : memref<8x1xi32, #tpu.memory_space<vmem>>, vector<8x1xi32>
    %cst = arith.constant dense<0xFF800000> : vector<8xf32>
    %5 = vector.multi_reduction <maximumf>, %3, %cst [1] : vector<8x32xf32> to vector<8xf32>
    %6 = vector.shape_cast %5 : vector<8xf32> to vector<8x1xf32>
    %7 = vector.broadcast %6 : vector<8x1xf32> to vector<8x32xf32>
    %8 = arith.subf %3, %7 : vector<8x32xf32>
    %9 = math.exp %8 : vector<8x32xf32>
    %cst_4 = arith.constant dense<0.000000e+00> : vector<8xf32>
    %10 = vector.multi_reduction <add>, %9, %cst_4 [1] : vector<8x32xf32> to vector<8xf32>
    %11 = vector.shape_cast %10 : vector<8xf32> to vector<8x1xf32>
    %12 = tpu.iota {dimensions = array<i32: 1>} : vector<8x32xi32>
    %13 = vector.broadcast %4 : vector<8x1xi32> to vector<8x32xi32>
    %14 = arith.cmpi eq, %12, %13 : vector<8x32xi32>
    %cst_5 = arith.constant 0.000000e+00 : f32
    %15 = vector.broadcast %cst_5 : f32 to vector<8x32xf32>
    %16 = arith.select %14, %8, %15 : vector<8x32xi1>, vector<8x32xf32>
    %cst_6 = arith.constant dense<0.000000e+00> : vector<8xf32>
    %17 = vector.multi_reduction <add>, %16, %cst_6 [1] : vector<8x32xf32> to vector<8xf32>
    %18 = vector.shape_cast %17 : vector<8xf32> to vector<8x1xf32>
    %cst_7 = arith.constant 0.000000e+00 : f32
    %19 = vector.broadcast %cst_7 : f32 to vector<8x32xf32>
    %20 = arith.select %14, %9, %19 : vector<8x32xi1>, vector<8x32xf32>
    %cst_8 = arith.constant dense<0.000000e+00> : vector<8xf32>
    %21 = vector.multi_reduction <add>, %20, %cst_8 [1] : vector<8x32xf32> to vector<8xf32>
    %22 = vector.shape_cast %21 : vector<8xf32> to vector<8x1xf32>
    %23 = math.log %11 : vector<8x1xf32>
    %24 = arith.subf %18, %23 : vector<8x1xf32>
    %25 = arith.divf %22, %11 : vector<8x1xf32>
    %cst_9 = arith.constant 1.000000e+00 : f32
    %26 = vector.broadcast %cst_9 : f32 to vector<8x1xf32>
    %27 = arith.subf %26, %25 : vector<8x1xf32>
    %cst_10 = arith.constant 0.000000e+00 : f32
    %28 = vector.broadcast %cst_10 : f32 to vector<8x1xf32>
    %29 = arith.maximumf %27, %28 : vector<8x1xf32>
    %30 = arith.mulf %29, %29 : vector<8x1xf32>
    %31 = arith.mulf %30, %24 : vector<8x1xf32>
    %c8_i32 = arith.constant 8 : i32
    %32 = arith.muli %arg0, %c8_i32 : i32
    %33 = tpu.iota {dimensions = array<i32: 0>} : vector<8x1xi32>
    %34 = vector.broadcast %32 : i32 to vector<8x1xi32>
    %35 = arith.addi %34, %33 : vector<8x1xi32>
    %c20_i32 = arith.constant 20 : i32
    %36 = vector.broadcast %c20_i32 : i32 to vector<8x1xi32>
    %37 = arith.cmpi slt, %35, %36 : vector<8x1xi32>
    %cst_11 = arith.constant 0.000000e+00 : f32
    %38 = vector.broadcast %cst_11 : f32 to vector<8x1xf32>
    %39 = arith.select %37, %31, %38 : vector<8x1xi1>, vector<8x1xf32>
    %c0_12 = arith.constant 0 : index
    %c0_13 = arith.constant 0 : index
    %40 = vector.load %arg4[%c0_12, %c0_13] : memref<1x1xf32, #tpu.memory_space<vmem>>, vector<1x1xf32>
    %41 = vector.shape_cast %39 : vector<8x1xf32> to vector<1x8x1xf32>
    %cst_14 = arith.constant dense<0.000000e+00> : vector<1xf32>
    %42 = vector.multi_reduction <add>, %41, %cst_14 [1, 2] : vector<1x8x1xf32> to vector<1xf32>
    %43 = vector.shape_cast %42 : vector<1xf32> to vector<1x1x1xf32>
    %44 = vector.extract %43[0, 0, 0] : f32 from vector<1x1x1xf32>
    %45 = vector.broadcast %44 : f32 to vector<1x1xf32>
    %46 = arith.addf %40, %45 : vector<1x1xf32>
    %c0_15 = arith.constant 0 : index
    %c0_16 = arith.constant 0 : index
    %47 = vector.load %arg4[%c0_15, %c0_16] : memref<1x1xf32, #tpu.memory_space<vmem>>, vector<1x1xf32>
    tpu.vector_store %arg4[%c0_15, %c0_16], %46 {strides = array<i32>} : memref<1x1xf32, #tpu.memory_space<vmem>>, vector<1x1xf32>,
    %c2_i32 = arith.constant 2 : i32
    %48 = arith.cmpi eq, %arg0, %c2_i32 : i32
    %49 = arith.extui %48 : i1 to i32
    %c0_i32_17 = arith.constant 0 : i32
    %50 = arith.cmpi ne, %49, %c0_i32_17 : i32
    scf.if %50 {
      %c0_18 = arith.constant 0 : index
      %c0_19 = arith.constant 0 : index
      %51 = vector.load %arg4[%c0_18, %c0_19] : memref<1x1xf32, #tpu.memory_space<vmem>>, vector<1x1xf32>
      %cst_20 = arith.constant 0.000000e+00 : f32
      %52 = vector.broadcast %cst_20 : f32 to vector<1x1xf32>
      %53 = arith.subf %52, %51 : vector<1x1xf32>
      %cst_21 = arith.constant 2.000000e+01 : f32
      %54 = vector.broadcast %cst_21 : f32 to vector<1x1xf32>
      %55 = arith.divf %53, %54 : vector<1x1xf32>
      %c0_22 = arith.constant 0 : index
      %c0_23 = arith.constant 0 : index
      %56 = vector.load %arg3[%c0_22, %c0_23] : memref<1x1xf32, #tpu.memory_space<vmem>>, vector<1x1xf32>
      tpu.vector_store %arg3[%c0_22, %c0_23], %55 {strides = array<i32>} : memref<1x1xf32, #tpu.memory_space<vmem>>, vector<1x1xf32>,
    } else {
    }
    return
  }
  func.func @transform_0(%arg0: i32) -> (i32, i32) {
    %c0_i32 = arith.constant 0 : i32
    %c0_i32_0 = arith.constant 0 : i32
    return %arg0, %c0_i32 : i32, i32
  }
  func.func @transform_1(%arg0: i32) -> (i32, i32) {
    %c0_i32 = arith.constant 0 : i32
    %c0_i32_0 = arith.constant 0 : i32
    return %arg0, %c0_i32 : i32, i32
  }
  func.func @transform_2(%arg0: i32) -> (i32, i32) {
    %c0_i32 = arith.constant 0 : i32
    %c0_i32_0 = arith.constant 0 : i32
    %c0_i32_1 = arith.constant 0 : i32
    return %c0_i32, %c0_i32_0 : i32, i32
  }
}

</mosaic_0001>

<llo_original>
// kernel: tpu_custom_call.1
$region0: #{tpu_custom_call.1}
  #allocation0 [shape = 'u32[]', space=smem, size = 0x4, offset = 0x4, fixed_abs, tag = 'smem constant byte address 0x4 - core index']
  #allocation1 [shape = 'u32[144,128]{1,0:T(1,128)}', space=vmem, size = 0x12000, scoped, tag = 'internal scratch']
  #allocation2 [shape = 'f32[1,1]{1,0:T(1,128)}', space=vmem, size = 0x200, scoped, tag = 'scratch operand']
  %s0 = inlined_call_operand.vmem [shape: f32[24,32], index: 0, kind: input, shape index: {}]
  %s1 = inlined_call_operand.vmem [shape: s32[24,1], index: 1, kind: input, shape index: {}]
  %s2 = inlined_call_operand.hbm [shape: f32[1,1], index: 2, kind: output, shape index: {}]
  %s3 = sld [smem:[#allocation0]]
  $region49: #{tpu_custom_call.1} parent=0
    _
  %s5 = ssub.s32 1, %s3
  %s6 = scalar_select 0, %s5, %s3
  $region1: #{tpu_custom_call.1} parent=0
    #allocation3 [shape = 'u8[512]{0}', space=vmem, size = 0x400, scoped, tag = 'output window, operand 0, single buffered']
    #allocation4 [shape = 's32[2]{0}', space=sflag, size = 0x8, scoped, tag = 'scoped memory for tpu_custom_call.1']
    %7 = vsyncpa [#allocation4], 0
    loop: start=0, step=1, limit=5
    $region2: #{tpu_custom_call.1} parent=1 // loop_pre_header
      _
    $region3: #{tpu_custom_call.1} parent=1 // loop_header
      %s9 = sphi 0, %s13
      %p10 = scmp.ge.s32.totalorder %s9, 5
      %s19 = sphi 0, %s21
      %s22 = sphi 0, %s19
      %s23 = sphi 0, %s22
      %s39 = sphi 0, %s23
      %s45 = sphi 0, %s47
      %s48 = sphi 0, %s45
      %s49 = sphi 0, %s48
      %s65 = sphi 0, %s49
      %s69 = sphi 0, %s69
      %s71 = sphi 0, %s69
      %s72 = sphi 0, %s71
      %s86 = sphi 0, %s72
    $region4: #{tpu_custom_call.1} parent=1 // loop_header_branch
      %12 = sbr.rel (%p10) target = $region8
    $region5: #{tpu_custom_call.1} parent=1 // loop_body
      %s14 = ssub.s32 %s9, 1
      %s15 = ssub.s32 %s9, 2
      %s16 = sadd.s32 %s9, 1
      %s17 = ssub.s32 %s9, %s16
      %p18 = scmp.eq.s32.totalorder %s17, 0
      %s20 = sadd.s32 %s19, 1
      %s21 = scalar_select %p18, %s19, %s20
      %p24 = pneg %p18
      %p25 = scmp.eq.s32.totalorder %s9, 2
      %p26 = por %p24, %p25
      %p27 = scmp.ne.s32.totalorder %s19, %s22
      %p28 = scmp.eq.s32.totalorder %s9, 0
      %p29 = por %p27, %p28
      %p30 = scmp.ne.s32.totalorder %s19, %s22
      %p31 = scmp.eq.s32.totalorder %s14, 2
      %p32 = por %p30, %p31
      %p33 = scmp.ne.s32.totalorder %s22, %s23
      %p34 = scmp.eq.s32.totalorder %s14, 0
      %p35 = por %p33, %p34
      %p36 = scmp.ne.s32.totalorder %s22, %s23
      %p37 = scmp.eq.s32.totalorder %s15, 2
      %p38 = por %p36, %p37
      %p40 = scmp.ne.s32.totalorder %s23, %s39
      %p41 = scmp.eq.s32.totalorder %s15, 0
      %p42 = por %p40, %p41
      %s43 = ssub.s32 %s9, %s16
      %p44 = scmp.eq.s32.totalorder %s43, 0
      %s46 = sadd.s32 %s45, 1
      %s47 = scalar_select %p44, %s45, %s46
      %p50 = pneg %p44
      %p51 = scmp.eq.s32.totalorder %s9, 2
      %p52 = por %p50, %p51
      %p53 = scmp.ne.s32.totalorder %s45, %s48
      %p54 = scmp.eq.s32.totalorder %s9, 0
      %p55 = por %p53, %p54
      %p56 = scmp.ne.s32.totalorder %s45, %s48
      %p57 = scmp.eq.s32.totalorder %s14, 2
      %p58 = por %p56, %p57
      %p59 = scmp.ne.s32.totalorder %s48, %s49
      %p60 = scmp.eq.s32.totalorder %s14, 0
      %p61 = por %p59, %p60
      %p62 = scmp.ne.s32.totalorder %s48, %s49
      %p63 = scmp.eq.s32.totalorder %s15, 2
      %p64 = por %p62, %p63
      %p66 = scmp.ne.s32.totalorder %s49, %s65
      %p67 = scmp.eq.s32.totalorder %s15, 0
      %p68 = por %p66, %p67
      %s70 = sadd.s32 %s69, 1
      %p73 = scmp.eq.s32.totalorder %s9, 2
      %p74 = scmp.ne.s32.totalorder %s69, %s71
      %p75 = scmp.eq.s32.totalorder %s9, 0
      %p76 = por %p74, %p75
      %p77 = scmp.ne.s32.totalorder %s69, %s71
      %p78 = scmp.eq.s32.totalorder %s14, 2
      %p79 = por %p77, %p78
      %p80 = scmp.ne.s32.totalorder %s71, %s72
      %p81 = scmp.eq.s32.totalorder %s14, 0
      %p82 = por %p80, %p81
      %p83 = scmp.ne.s32.totalorder %s71, %s72
      %p84 = scmp.eq.s32.totalorder %s15, 2
      %p85 = por %p83, %p84
      %p87 = scmp.ne.s32.totalorder %s72, %s86
      %p88 = scmp.eq.s32.totalorder %s15, 0
      %p89 = por %p87, %p88
      %p90 = scmp.le.s32.totalorder 1, %s9
      %p91 = scmp.lt.s32.totalorder %s9, 4
      %p92 = pnand %p90, %p91
      %p93 = pneg %p92
      // Predicated region
      $region9: #{tpu_custom_call.1} parent=5 // pred_check
        _
      $region10: #{tpu_custom_call.1} parent=5 // pred_check_branch
        %95 = sbr.rel (%p92) target = $region12
      $region11: #{tpu_custom_call.1} parent=5 // pred_region
        %s96 = ssub.s32 %s9, 1
      $region12: #{tpu_custom_call.1} parent=5 // pred_fallthru
        _
      %p97 = scmp.lt.s32.totalorder %s9, 3
      // Predicated region
      $region13: #{tpu_custom_call.1} parent=5 // pred_check
        %p98 = pneg %p97
      $region14: #{tpu_custom_call.1} parent=5 // pred_check_branch
        %100 = sbr.rel (%p98) target = $region16
      $region15: #{tpu_custom_call.1} parent=5 // pred_region
        // Predicated region
        $region17: #{tpu_custom_call.1} parent=15 // pred_check
          %p101 = pneg %p29
        $region18: #{tpu_custom_call.1} parent=15 // pred_check_branch
          %103 = sbr.rel (%p101) target = $region20
        $region19: #{tpu_custom_call.1} parent=15 // pred_region
          %p104 = scmp.lt.s32.totalorder %s9, 2
          %s105 = scalar_select %p104, %s9, 2
          %s106 = smul.addr %s105, 8
          %s107 = scalar_lea.vmem %s0, %s106
        $region20: #{tpu_custom_call.1} parent=15 // pred_fallthru
          _
        // Predicated region
        $region21: #{tpu_custom_call.1} parent=15 // pred_check
          %p108 = pneg %p55
        $region22: #{tpu_custom_call.1} parent=15 // pred_check_branch
          %110 = sbr.rel (%p108) target = $region24
        $region23: #{tpu_custom_call.1} parent=15 // pred_region
          %p111 = scmp.lt.s32.totalorder %s9, 2
          %s112 = scalar_select %p111, %s9, 2
          %s113 = smul.addr %s112, 8
          %s114 = scalar_lea.vmem %s1, %s113
        $region24: #{tpu_custom_call.1} parent=15 // pred_fallthru
          _
      $region16: #{tpu_custom_call.1} parent=5 // pred_fallthru
        _
      %p115 = scmp.le.s32.totalorder 1, %s9
      %p116 = scmp.lt.s32.totalorder %s9, 4
      %p117 = pnand %p115, %p116
      %p118 = pneg %p117
      // Predicated region
      $region25: #{tpu_custom_call.1} parent=5 // pred_check
        _
      $region26: #{tpu_custom_call.1} parent=5 // pred_check_branch
        %120 = sbr.rel (%p117) target = $region28
      $region27: #{tpu_custom_call.1} parent=5 // pred_region
        %s121 = ssub.s32 %s9, 1
        %p122 = scmp.lt.s32.totalorder %s14, 2
        %s123 = scalar_select %p122, %s14, 2
        %s124 = smul.addr %s123, 8
        %s125 = scalar_lea.vmem %s0, %s124
        %p126 = pneg %p35
        %p127 = pneg %p32
        %p128 = scmp.lt.s32.totalorder %s14, 2
        %s129 = scalar_select %p128, %s14, 2
        %s130 = smul.addr %s129, 8
        %s131 = scalar_lea.vmem %s1, %s130
        %p132 = pneg %p61
        %p133 = pneg %p58
        %p134 = pneg %p82
        %p135 = pneg %p79
        %p136 = scmp.lt.s32.totalorder %s14, 2
        %s137 = scalar_select %p136, %s14, 2
        %s138 = smul.addr %s137, 8
        %s139 = scalar_lea.vmem %s0, %s138
        %p140 = scmp.lt.s32.totalorder %s14, 2
        %s141 = scalar_select %p140, %s14, 2
        %s142 = smul.addr %s141, 8
        %s143 = scalar_lea.vmem %s1, %s142
        %p144 = scmp.eq.s32.totalorder %s14, 0
        // Predicated region
        $region29: #{tpu_custom_call.1} parent=27 // pred_check
          %p145 = pneg %p144
        $region30: #{tpu_custom_call.1} parent=27 // pred_check_branch
          %147 = sbr.rel (%p145) target = $region32
        $region31: #{tpu_custom_call.1} parent=27 // pred_region
          %vm148 = vcmask 0
          %149 = vst.msk [vmem:[#allocation2] sm:$0x1] %vm148, 0.0
        $region32: #{tpu_custom_call.1} parent=27 // pred_fallthru
          _
        %v150 = vld [vmem:[%s139] sm:$0xff]
        %v151 = vld [vmem:[%s143] sm:$0xff]
        %vm152 = vcmask 261120
        %v153 = vsel %vm152, %v150, -inf
        %154 = vmax.xlane.f32.xlu0 %v153
        %v155 = vpop.xlane.xlu0 %154
        %v156 = vsub.f32 %v150, %v155
        %v157 = vmul.f32 %v156, 1.442695
        %v158 = vpow.pop %v157
        %v159 = vsel %vm152, %v158, 0.0
        %160 = vadd.xlane.f32.xlu0 %v159
        %v161 = vpop.xlane.xlu0 %160
        %v162 = vlaneseq
        %v163 = vand.u32 %v162, 127
        %164 = vset.pattern.permute.xlu0 0
        %165 = vperm.xlu0 %164, %v151
        %v166 = vpop.permute.xlu0 %165
        %vm167 = vcmp.eq.s32.totalorder %v163, %v166
        %v168 = vsel %vm167, %v156, 0.0
        %v169 = vsel %vm152, %v168, 0.0
        %170 = vadd.xlane.f32.xlu0 %v169
        %v171 = vpop.xlane.xlu0 %170
        %v172 = vsel %vm167, %v158, 0.0
        %v173 = vsel %vm152, %v172, 0.0
        %174 = vadd.xlane.f32.xlu0 %v173
        %v175 = vpop.xlane.xlu0 %174
        %v176 = vlog2.pop %v161
        %v177 = vmul.f32 %v176, 0.6931472
        %v178 = vsub.f32 %v171, %v177
        %v179 = vrcp.pop %v161
        %v180 = vmul.f32 %v175, %v179
        %v181 = vsub.f32 1.0, %v180
        %v182 = vmax.f32 %v181, 0.0
        %v183 = vmul.f32 %v182, %v182
        %v184 = vmul.f32 %v183, %v178
        %s185 = smul.u32 %s14, 8
        %v186 = vlaneseq
        %v187 = vshrl.u32 %v186, 7
        %v188 = vstv %s185
        %v189 = vadd.s32 %v188, %v187
        %vm190 = vcmp.lt.s32.totalorder %v189, 20
        %v191 = vsel %vm190, %v184, 0.0
        %v192 = vld [vmem:[#allocation2] sm:$0x1]
        %vm193 = vcmask 7168
        %v194 = vsel %vm193, %v191, 0.0
        %195 = vadd.xlane.f32.xlu0 %v194
        %v196 = vpop.xlane.xlu0 %195
        %v197 = vrot.slane %v196, 4
        %v198 = vadd.f32 %v196, %v197
        %v199 = vrot.slane %v198, 2
        %v200 = vadd.f32 %v198, %v199
        %v201 = vrot.slane %v200, 1
        %v202 = vadd.f32 %v200, %v201
        %s203 = vtos %v202
        %v204 = vstv %s203
        %v205 = vadd.f32 %v192, %v204
        %vm206 = vcmask 0
        %207 = vst.msk [vmem:[#allocation2] sm:$0x1] %vm206, %v205
        %p208 = scmp.eq.s32.totalorder %s14, 2
        // Predicated region
        $region33: #{tpu_custom_call.1} parent=27 // pred_check
          %p209 = pneg %p208
        $region34: #{tpu_custom_call.1} parent=27 // pred_check_branch
          %211 = sbr.rel (%p209) target = $region36
        $region35: #{tpu_custom_call.1} parent=27 // pred_region
          %v212 = vld [vmem:[#allocation2] sm:$0x1]
          %v213 = vsub.f32 0.0, %v212
          %v214 = vrcp.pop 20.0
          %v215 = vmul.f32 %v213, %v214
          %216 = vst.msk [vmem:[#allocation3] sm:$0x1] %vm206, %v215
        $region36: #{tpu_custom_call.1} parent=27 // pred_fallthru
          _
        // Predicated region
        $region37: #{tpu_custom_call.1} parent=27 // pred_check
          %p217 = pneg %p79
        $region38: #{tpu_custom_call.1} parent=27 // pred_check_branch
          %219 = sbr.rel (%p217) target = $region40
        $region39: #{tpu_custom_call.1} parent=27 // pred_region
          %s221 = ssub.s32 16, 16
          %222 = vsyncadd [#allocation4], %s221
          %s224 = sshll.u32 [#allocation3], 4
          %s225 = int_to_ptr.vmem [resolvable:$true] %s224
          %227 = dma.vmem_to_hbm [thread:$0]  %s225, 16, %s2, [#allocation4]
        $region40: #{tpu_custom_call.1} parent=27 // pred_fallthru
          _
        // Predicated region
        $region41: #{tpu_custom_call.1} parent=27 // pred_check
          %p228 = pneg %p79
        $region42: #{tpu_custom_call.1} parent=27 // pred_check_branch
          %230 = sbr.rel (%p228) target = $region44
        $region43: #{tpu_custom_call.1} parent=27 // pred_region
          %231 = dma.done [#allocation4], 16
        $region44: #{tpu_custom_call.1} parent=27 // pred_fallthru
          _
      $region28: #{tpu_custom_call.1} parent=5 // pred_fallthru
        _
      %p232 = scmp.le.s32.totalorder 2, %s9
      // Predicated region
      $region45: #{tpu_custom_call.1} parent=5 // pred_check
        %p233 = pneg %p232
      $region46: #{tpu_custom_call.1} parent=5 // pred_check_branch
        %235 = sbr.rel (%p233) target = $region48
      $region47: #{tpu_custom_call.1} parent=5 // pred_region
        %s236 = ssub.s32 %s9, 2
      $region48: #{tpu_custom_call.1} parent=5 // pred_fallthru
        _
    $region6: #{tpu_custom_call.1} parent=1 // loop_footer
      %s13 = sadd.s32 1, %s9
    $region7: #{tpu_custom_call.1} parent=1 // loop_footer_branch
      %8 = sbr.rel target = $region3
    $region8: #{tpu_custom_call.1} parent=1 // loop_exit
      _
    %237 = vsyncpa [#allocation4], 1
    %s238 = scalar_lea.sflag [#allocation4], 1
    %239 = vsyncpa %s238, 1

</llo_original>
